<compile_context>
chip_gen: v7x
topology: tpu7x:2x2x1
jax: 0.10.0
libtpu: 0.0.40
codegen_flags: <defaults>
</compile_context>

<pallas_src>
import math

import jax
import jax.numpy as jnp
from jax.experimental import pallas as pl
from jax.experimental.pallas import tpu as pltpu

_P = 128  # lane width used for the padded fc2..fc6 pipeline


# ---------------------------------------------------------------------------
# Kernel
# ---------------------------------------------------------------------------

def _make_critic_kernel(action_size, fc1):
    """Build the kernel with static layer sizes closed over."""
    P = _P

    def kernel(state_ref, action_ref, w1_ref, w2s_ref, wtail_ref, sp_ref, out_ref):
        f32 = jnp.float32
        bf16 = jnp.bfloat16

        state = state_ref[...].astype(bf16)     # cast in-kernel (VPU slack is free)
        action = action_ref[...]                # [Bt, A] f32

        # fc1 + relu  (MXU, f32 accumulate)
        xs = jnp.dot(state, w1_ref[...], preferred_element_type=f32)
        xs = jnp.maximum(xs + sp_ref[0:1, 0:fc1], 0.0).astype(bf16)

        # fc2 over cat([xs, action]) == xs @ W2s (MXU) + action-part (VPU) + b2
        x = jnp.dot(xs, w2s_ref[...], preferred_element_type=f32)   # [Bt, 128]
        apart = sp_ref[1:2, 0:P]                                    # b2 (lane-padded)
        for k in range(action_size):                                # K=4 broadcast-FMAs, f32
            apart = apart + action[:, k:k + 1] * sp_ref[6 + k:7 + k, 0:P]
        x = jnp.maximum(x + apart, 0.0).astype(bf16)                # [Bt, 128]

        # fc3 / fc4 / fc5 + relu: uniform lane-padded [Bt,128] @ [128,128]
        for layer in range(3):
            w = wtail_ref[layer * P:(layer + 1) * P, :]
            b = sp_ref[2 + layer:3 + layer, 0:P]
            x = jnp.maximum(jnp.dot(x, w, preferred_element_type=f32) + b,
                            0.0).astype(bf16)

        # fc6 (no activation): padded to 128 cols, only column 0 is real.
        y = jnp.dot(x, wtail_ref[3 * P:4 * P, :], preferred_element_type=f32)
        out_ref[...] = y[:, 0:1] + sp_ref[5:6, 0:1]                 # [Bt, 1]

    return kernel


# ---------------------------------------------------------------------------
# Wrapper
# ---------------------------------------------------------------------------

def _cdiv(a, b):
    return -(-a // b)


def _round_up(x, m):
    return (x + m - 1) // m * m


def _default_min_blocks():
    # v7x has 2 TensorCores per chip: keep >=2 parallel grid steps so the
    # "parallel" batch axis shards across both.  v5e/v6e: 1 TC -> 1 step.
    try:
        kind = jax.devices()[0].device_kind.lower()
        if "v7" in kind or "7x" in kind:
            return 2
    except Exception:
        pass
    return 1


def critic_forward(state, action, packed, *, block_b=1024, min_blocks=None):
    """state: [B, state_size] f32, action: [B, action_size] f32 -> [B, 1] f32."""
    state_size, action_size, fc1, fc2, fc3, fc4, fc5 = packed["dims"]
    B, S = state.shape
    A = action.shape[1]
    assert S == state_size, f"state feature dim {S} != packed state_size {state_size}"
    assert A == action_size, f"action dim {A} != packed action_size {action_size}"

    if min_blocks is None:
        min_blocks = _default_min_blocks()

    # Fewest grid steps that respect block_b and min_blocks (8-row aligned).
    n_blocks = max(min_blocks, _cdiv(B, block_b))
    bb = _round_up(_cdiv(B, n_blocks), 8)
    Bp = _round_up(B, bb)

    if Bp != B:  # only pad when actually required (avoid wrapper dispatches)
        state_in = jnp.pad(state, ((0, Bp - B), (0, 0)))
        action_in = jnp.pad(action, ((0, Bp - B), (0, 0)))
    else:
        state_in, action_in = state, action

    w1 = packed["w1"]        # [S, fc1]      bf16
    w2s = packed["w2s"]      # [fc1, 128]    bf16 (fc2 lane-padded)
    wtail = packed["wtail"]  # [512, 128]    bf16 (w3|w4|w5|w6, each padded 128x128)
    small = packed["small"]  # [6 + A, 256]  f32  (b1..b6 rows, then w2a rows)

    kernel = _make_critic_kernel(action_size, fc1)

    out = pl.pallas_call(
        kernel,
        out_shape=jax.ShapeDtypeStruct((Bp, 1), jnp.float32),
        grid=(Bp // bb,),
        in_specs=[
            pl.BlockSpec((bb, S), lambda i: (i, 0)),       # state (batch tiled)
            pl.BlockSpec((bb, A), lambda i: (i, 0)),       # action (batch tiled)
            pl.BlockSpec(w1.shape, lambda i: (0, 0)),      # resident weights
            pl.BlockSpec(w2s.shape, lambda i: (0, 0)),
            pl.BlockSpec(wtail.shape, lambda i: (0, 0)),
            pl.BlockSpec(small.shape, lambda i: (0, 0)),
        ],
        out_specs=pl.BlockSpec((bb, 1), lambda i: (i, 0)),
        compiler_params=pltpu.CompilerParams(
            dimension_semantics=("parallel",)),
    )(state_in, action_in, w1, w2s, wtail, small)

    return out if Bp == B else out[:B]


# ---------------------------------------------------------------------------
# Parameter init (mirrors the PyTorch module's reset_parameters) and packing
# ---------------------------------------------------------------------------

def _uniform(key, shape, lo, hi):
    return jax.random.uniform(key, shape, jnp.float32, minval=lo, maxval=hi)


def init_critic_params(key, state_size, action_size,
                       fc1=256, fc2=128, fc3=64, fc4=32, fc5=16):
    """hidden layers: U(-1/sqrt(fan_in), 1/sqrt(fan_in)); final layer: U(-3e-3, 3e-3).
    Weights stored transposed as [in, out]; biases as [1, out]."""
    ks = jax.random.split(key, 12)
    p = {}

    def lim(fan_in):
        return 1.0 / math.sqrt(fan_in)

    p["w1"] = _uniform(ks[0], (state_size, fc1), -lim(state_size), lim(state_size))
    p["b1"] = _uniform(ks[1], (1, fc1), -lim(state_size), lim(state_size))

    l2 = lim(fc1 + action_size)
    p["w2s"] = _uniform(ks[2], (fc1, fc2), -l2, l2)
    p["w2a"] = _uniform(ks[3], (action_size, fc2), -l2, l2)
    p["b2"] = _uniform(ks[4], (1, fc2), -l2, l2)

    p["w3"] = _uniform(ks[5], (fc2, fc3), -lim(fc2), lim(fc2))
    p["b3"] = _uniform(ks[6], (1, fc3), -lim(fc2), lim(fc2))
    p["w4"] = _uniform(ks[7], (fc3, fc4), -lim(fc3), lim(fc3))
    p["b4"] = _uniform(ks[8], (1, fc4), -lim(fc3), lim(fc3))
    p["w5"] = _uniform(ks[9], (fc4, fc5), -lim(fc4), lim(fc4))
    p["b5"] = _uniform(ks[10], (1, fc5), -lim(fc4), lim(fc4))

    k6a, k6b = jax.random.split(ks[11])
    p["w6"] = _uniform(k6a, (fc5, 1), -3e-3, 3e-3)
    p["b6"] = _uniform(k6b, (1, 1), -3e-3, 3e-3)

    p["dims"] = (state_size, action_size, fc1, fc2, fc3, fc4, fc5)
    return p


def pack_critic_params(p):
    """Pack into the kernel layout: bf16 weights lane-padded to 128 output
    columns, one stacked tail slab, one small f32 bias/w2a array."""
    state_size, A, fc1, fc2, fc3, fc4, fc5 = p["dims"]
    P = _P
    bf16 = jnp.bfloat16
    assert fc1 % P == 0 and fc2 <= P and fc3 <= P and fc4 <= P and fc5 <= P

    w1 = p["w1"].astype(bf16)                                      # [S, fc1]

    w2s = jnp.zeros((fc1, P), bf16).at[:, 0:fc2].set(p["w2s"].astype(bf16))

    wtail = jnp.zeros((4 * P, P), bf16)
    wtail = wtail.at[0 * P:0 * P + fc2, 0:fc3].set(p["w3"].astype(bf16))
    wtail = wtail.at[1 * P:1 * P + fc3, 0:fc4].set(p["w4"].astype(bf16))
    wtail = wtail.at[2 * P:2 * P + fc4, 0:fc5].set(p["w5"].astype(bf16))
    wtail = wtail.at[3 * P:3 * P + fc5, 0:1].set(p["w6"].astype(bf16))

    width = max(fc1, P)
    small = jnp.zeros((6 + A, width), jnp.float32)
    small = small.at[0, 0:fc1].set(p["b1"][0])
    small = small.at[1, 0:fc2].set(p["b2"][0])
    small = small.at[2, 0:fc3].set(p["b3"][0])
    small = small.at[3, 0:fc4].set(p["b4"][0])
    small = small.at[4, 0:fc5].set(p["b5"][0])
    small = small.at[5, 0:1].set(p["b6"][0])
    small = small.at[6:6 + A, 0:fc2].set(p["w2a"])

    return {"w1": w1, "w2s": w2s, "wtail": wtail, "small": small, "dims": p["dims"]}


# ---------------------------------------------------------------------------
# Pure-JAX reference (mirrors the kernel math: bf16 weights, f32 accumulation)
# ---------------------------------------------------------------------------

def critic_reference(state, action, p):
    bf16, f32 = jnp.bfloat16, jnp.float32
    s = state.astype(bf16)
    xs = jnp.maximum(jnp.dot(s, p["w1"].astype(bf16), preferred_element_type=f32)
                     + p["b1"], 0.0).astype(bf16)
    apart = p["b2"]
    for k in range(action.shape[1]):
        apart = apart + action[:, k:k + 1] * p["w2a"][k:k + 1, :]
    x = jnp.maximum(jnp.dot(xs, p["w2s"].astype(bf16), preferred_element_type=f32)
                    + apart, 0.0).astype(bf16)
    x = jnp.maximum(jnp.dot(x, p["w3"].astype(bf16), preferred_element_type=f32)
                    + p["b3"], 0.0).astype(bf16)
    x = jnp.maximum(jnp.dot(x, p["w4"].astype(bf16), preferred_element_type=f32)
                    + p["b4"], 0.0).astype(bf16)
    x = jnp.maximum(jnp.dot(x, p["w5"].astype(bf16), preferred_element_type=f32)
                    + p["b5"], 0.0).astype(bf16)
    return jnp.dot(x, p["w6"].astype(bf16), preferred_element_type=f32) + p["b6"]


# ---------------------------------------------------------------------------
# Demo / correctness check (small deterministic shapes)
# ---------------------------------------------------------------------------

if __name__ == "__main__":
    STATE_SIZE = 33
    ACTION_SIZE = 4
    BATCH = 64          # small demo batch; production RL batches use the same path

    key = jax.random.PRNGKey(0)
    k_params, k_state, k_action = jax.random.split(key, 3)

    params = init_critic_params(k_params, STATE_SIZE, ACTION_SIZE)
    packed = pack_critic_params(params)

    state = jax.random.normal(k_state, (BATCH, STATE_SIZE), jnp.float32)
    action = jax.random.uniform(k_action, (BATCH, ACTION_SIZE), jnp.float32,
                                minval=-1.0, maxval=1.0)

    out = critic_forward(state, action, packed)
    out = jax.block_until_ready(out)

    ref = critic_reference(state, action, params)
    assert out.shape == (BATCH, 1)
    assert jnp.allclose(out, ref, atol=2e-4, rtol=1e-3), "mismatch vs reference"

    # TODO(synk): optional further DMA win — merge state+action into one
    # lane-aligned input slab at the data-producer side (not in this wrapper).

    print("KERNEL_OK")
</pallas_src>

<mosaic_0001>
module attributes {stable_mosaic.version = 11 : i64} {
  func.func @kernel(%arg0: i32, %arg1: memref<64x33xf32, #tpu.memory_space<vmem>>, %arg2: memref<64x4xf32, #tpu.memory_space<vmem>>, %arg3: memref<33x256xbf16, #tpu.memory_space<vmem>>, %arg4: memref<256x128xbf16, #tpu.memory_space<vmem>>, %arg5: memref<512x128xbf16, #tpu.memory_space<vmem>>, %arg6: memref<10x256xf32, #tpu.memory_space<vmem>>, %arg7: memref<64x1xf32, #tpu.memory_space<vmem>>) attributes {dimension_semantics = [#tpu.dimension_semantics<parallel>], iteration_bounds = array<i64: 1>, scalar_prefetch = 0 : i64, scratch_operands = 0 : i64, tpu.core_type = #tpu.core_type<tc>, window_params = [{transform_indices = @transform_0, window_bounds = array<i64: 64, 33>}, {transform_indices = @transform_1, window_bounds = array<i64: 64, 4>}, {pipeline_mode = #tpu.pipeline_mode<synchronous>, transform_indices = @transform_2, window_bounds = array<i64: 33, 256>}, {pipeline_mode = #tpu.pipeline_mode<synchronous>, transform_indices = @transform_3, window_bounds = array<i64: 256, 128>}, {pipeline_mode = #tpu.pipeline_mode<synchronous>, transform_indices = @transform_4, window_bounds = array<i64: 512, 128>}, {pipeline_mode = #tpu.pipeline_mode<synchronous>, transform_indices = @transform_5, window_bounds = array<i64: 10, 256>}, {transform_indices = @transform_6, window_bounds = array<i64: 64, 1>}]} {
    %c0 = arith.constant 0 : index
    %c0_0 = arith.constant 0 : index
    %0 = vector.load %arg1[%c0, %c0_0] : memref<64x33xf32, #tpu.memory_space<vmem>>, vector<64x33xf32>
    %1 = arith.truncf %0 : vector<64x33xf32> to vector<64x33xbf16>
    %c0_1 = arith.constant 0 : index
    %c0_2 = arith.constant 0 : index
    %2 = vector.load %arg2[%c0_1, %c0_2] : memref<64x4xf32, #tpu.memory_space<vmem>>, vector<64x4xf32>
    %c0_3 = arith.constant 0 : index
    %c0_4 = arith.constant 0 : index
    %3 = vector.load %arg3[%c0_3, %c0_4] : memref<33x256xbf16, #tpu.memory_space<vmem>>, vector<33x256xbf16>
    %cst = arith.constant dense<0.000000e+00> : vector<64x256xf32>
    %4 = tpu.matmul %1, %3, %cst {dimension_numbers = #tpu.dot_dimension_numbers<[1], [0], [0], [1], [0, 0, 1, 1], [], []>} : vector<64x33xbf16>, vector<33x256xbf16>, vector<64x256xf32> -> vector<64x256xf32>
    %c0_5 = arith.constant 0 : index
    %c0_6 = arith.constant 0 : index
    %5 = vector.load %arg6[%c0_5, %c0_6] : memref<10x256xf32, #tpu.memory_space<vmem>>, vector<1x256xf32>
    %6 = vector.broadcast %5 : vector<1x256xf32> to vector<64x256xf32>
    %7 = arith.addf %4, %6 : vector<64x256xf32>
    %cst_7 = arith.constant 0.000000e+00 : f32
    %8 = vector.broadcast %cst_7 : f32 to vector<64x256xf32>
    %9 = arith.maximumf %7, %8 : vector<64x256xf32>
    %10 = arith.truncf %9 : vector<64x256xf32> to vector<64x256xbf16>
    %c0_8 = arith.constant 0 : index
    %c0_9 = arith.constant 0 : index
    %11 = vector.load %arg4[%c0_8, %c0_9] : memref<256x128xbf16, #tpu.memory_space<vmem>>, vector<256x128xbf16>
    %cst_10 = arith.constant dense<0.000000e+00> : vector<64x128xf32>
    %12 = tpu.matmul %10, %11, %cst_10 {dimension_numbers = #tpu.dot_dimension_numbers<[1], [0], [0], [1], [0, 0, 1, 1], [], []>} : vector<64x256xbf16>, vector<256x128xbf16>, vector<64x128xf32> -> vector<64x128xf32>
    %c1 = arith.constant 1 : index
    %c0_11 = arith.constant 0 : index
    %13 = vector.load %arg6[%c1, %c0_11] : memref<10x256xf32, #tpu.memory_space<vmem>>, vector<1x128xf32>
    %14 = vector.extract_strided_slice %2 {offsets = [0, 0], sizes = [64, 1], strides = [1, 1]} : vector<64x4xf32> to vector<64x1xf32>
    %c6 = arith.constant 6 : index
    %c0_12 = arith.constant 0 : index
    %15 = vector.load %arg6[%c6, %c0_12] : memref<10x256xf32, #tpu.memory_space<vmem>>, vector<1x128xf32>
    %16 = vector.broadcast %14 : vector<64x1xf32> to vector<64x128xf32>
    %17 = vector.broadcast %15 : vector<1x128xf32> to vector<64x128xf32>
    %18 = arith.mulf %16, %17 : vector<64x128xf32>
    %19 = vector.broadcast %13 : vector<1x128xf32> to vector<64x128xf32>
    %20 = arith.addf %19, %18 : vector<64x128xf32>
    %21 = vector.extract_strided_slice %2 {offsets = [0, 1], sizes = [64, 1], strides = [1, 1]} : vector<64x4xf32> to vector<64x1xf32>
    %c7 = arith.constant 7 : index
    %c0_13 = arith.constant 0 : index
    %22 = vector.load %arg6[%c7, %c0_13] : memref<10x256xf32, #tpu.memory_space<vmem>>, vector<1x128xf32>
    %23 = vector.broadcast %21 : vector<64x1xf32> to vector<64x128xf32>
    %24 = vector.broadcast %22 : vector<1x128xf32> to vector<64x128xf32>
    %25 = arith.mulf %23, %24 : vector<64x128xf32>
    %26 = arith.addf %20, %25 : vector<64x128xf32>
    %27 = vector.extract_strided_slice %2 {offsets = [0, 2], sizes = [64, 1], strides = [1, 1]} : vector<64x4xf32> to vector<64x1xf32>
    %c8 = arith.constant 8 : index
    %c0_14 = arith.constant 0 : index
    %28 = vector.load %arg6[%c8, %c0_14] : memref<10x256xf32, #tpu.memory_space<vmem>>, vector<1x128xf32>
    %29 = vector.broadcast %27 : vector<64x1xf32> to vector<64x128xf32>
    %30 = vector.broadcast %28 : vector<1x128xf32> to vector<64x128xf32>
    %31 = arith.mulf %29, %30 : vector<64x128xf32>
    %32 = arith.addf %26, %31 : vector<64x128xf32>
    %33 = vector.extract_strided_slice %2 {offsets = [0, 3], sizes = [64, 1], strides = [1, 1]} : vector<64x4xf32> to vector<64x1xf32>
    %c9 = arith.constant 9 : index
    %c0_15 = arith.constant 0 : index
    %34 = vector.load %arg6[%c9, %c0_15] : memref<10x256xf32, #tpu.memory_space<vmem>>, vector<1x128xf32>
    %35 = vector.broadcast %33 : vector<64x1xf32> to vector<64x128xf32>
    %36 = vector.broadcast %34 : vector<1x128xf32> to vector<64x128xf32>
    %37 = arith.mulf %35, %36 : vector<64x128xf32>
    %38 = arith.addf %32, %37 : vector<64x128xf32>
    %39 = arith.addf %12, %38 : vector<64x128xf32>
    %cst_16 = arith.constant 0.000000e+00 : f32
    %40 = vector.broadcast %cst_16 : f32 to vector<64x128xf32>
    %41 = arith.maximumf %39, %40 : vector<64x128xf32>
    %42 = arith.truncf %41 : vector<64x128xf32> to vector<64x128xbf16>
    %c0_17 = arith.constant 0 : index
    %c0_18 = arith.constant 0 : index
    %43 = vector.load %arg5[%c0_17, %c0_18] : memref<512x128xbf16, #tpu.memory_space<vmem>>, vector<128x128xbf16>
    %c2 = arith.constant 2 : index
    %c0_19 = arith.constant 0 : index
    %44 = vector.load %arg6[%c2, %c0_19] : memref<10x256xf32, #tpu.memory_space<vmem>>, vector<1x128xf32>
    %cst_20 = arith.constant dense<0.000000e+00> : vector<64x128xf32>
    %45 = tpu.matmul %42, %43, %cst_20 {dimension_numbers = #tpu.dot_dimension_numbers<[1], [0], [0], [1], [0, 0, 1, 1], [], []>} : vector<64x128xbf16>, vector<128x128xbf16>, vector<64x128xf32> -> vector<64x128xf32>
    %46 = vector.broadcast %44 : vector<1x128xf32> to vector<64x128xf32>
    %47 = arith.addf %45, %46 : vector<64x128xf32>
    %cst_21 = arith.constant 0.000000e+00 : f32
    %48 = vector.broadcast %cst_21 : f32 to vector<64x128xf32>
    %49 = arith.maximumf %47, %48 : vector<64x128xf32>
    %50 = arith.truncf %49 : vector<64x128xf32> to vector<64x128xbf16>
    %c128 = arith.constant 128 : index
    %c0_22 = arith.constant 0 : index
    %51 = vector.load %arg5[%c128, %c0_22] : memref<512x128xbf16, #tpu.memory_space<vmem>>, vector<128x128xbf16>
    %c3 = arith.constant 3 : index
    %c0_23 = arith.constant 0 : index
    %52 = vector.load %arg6[%c3, %c0_23] : memref<10x256xf32, #tpu.memory_space<vmem>>, vector<1x128xf32>
    %cst_24 = arith.constant dense<0.000000e+00> : vector<64x128xf32>
    %53 = tpu.matmul %50, %51, %cst_24 {dimension_numbers = #tpu.dot_dimension_numbers<[1], [0], [0], [1], [0, 0, 1, 1], [], []>} : vector<64x128xbf16>, vector<128x128xbf16>, vector<64x128xf32> -> vector<64x128xf32>
    %54 = vector.broadcast %52 : vector<1x128xf32> to vector<64x128xf32>
    %55 = arith.addf %53, %54 : vector<64x128xf32>
    %cst_25 = arith.constant 0.000000e+00 : f32
    %56 = vector.broadcast %cst_25 : f32 to vector<64x128xf32>
    %57 = arith.maximumf %55, %56 : vector<64x128xf32>
    %58 = arith.truncf %57 : vector<64x128xf32> to vector<64x128xbf16>
    %c256 = arith.constant 256 : index
    %c0_26 = arith.constant 0 : index
    %59 = vector.load %arg5[%c256, %c0_26] : memref<512x128xbf16, #tpu.memory_space<vmem>>, vector<128x128xbf16>
    %c4 = arith.constant 4 : index
    %c0_27 = arith.constant 0 : index
    %60 = vector.load %arg6[%c4, %c0_27] : memref<10x256xf32, #tpu.memory_space<vmem>>, vector<1x128xf32>
    %cst_28 = arith.constant dense<0.000000e+00> : vector<64x128xf32>
    %61 = tpu.matmul %58, %59, %cst_28 {dimension_numbers = #tpu.dot_dimension_numbers<[1], [0], [0], [1], [0, 0, 1, 1], [], []>} : vector<64x128xbf16>, vector<128x128xbf16>, vector<64x128xf32> -> vector<64x128xf32>
    %62 = vector.broadcast %60 : vector<1x128xf32> to vector<64x128xf32>
    %63 = arith.addf %61, %62 : vector<64x128xf32>
    %cst_29 = arith.constant 0.000000e+00 : f32
    %64 = vector.broadcast %cst_29 : f32 to vector<64x128xf32>
    %65 = arith.maximumf %63, %64 : vector<64x128xf32>
    %66 = arith.truncf %65 : vector<64x128xf32> to vector<64x128xbf16>
    %c384 = arith.constant 384 : index
    %c0_30 = arith.constant 0 : index
    %67 = vector.load %arg5[%c384, %c0_30] : memref<512x128xbf16, #tpu.memory_space<vmem>>, vector<128x128xbf16>
    %cst_31 = arith.constant dense<0.000000e+00> : vector<64x128xf32>
    %68 = tpu.matmul %66, %67, %cst_31 {dimension_numbers = #tpu.dot_dimension_numbers<[1], [0], [0], [1], [0, 0, 1, 1], [], []>} : vector<64x128xbf16>, vector<128x128xbf16>, vector<64x128xf32> -> vector<64x128xf32>
    %69 = vector.extract_strided_slice %68 {offsets = [0, 0], sizes = [64, 1], strides = [1, 1]} : vector<64x128xf32> to vector<64x1xf32>
    %c5 = arith.constant 5 : index
    %c0_32 = arith.constant 0 : index
    %70 = vector.load %arg6[%c5, %c0_32] : memref<10x256xf32, #tpu.memory_space<vmem>>, vector<1x1xf32>
    %71 = vector.broadcast %70 : vector<1x1xf32> to vector<64x1xf32>
    %72 = arith.addf %69, %71 : vector<64x1xf32>
    %c0_33 = arith.constant 0 : index
    %c0_34 = arith.constant 0 : index
    %73 = vector.load %arg7[%c0_33, %c0_34] : memref<64x1xf32, #tpu.memory_space<vmem>>, vector<64x1xf32>
    tpu.vector_store %arg7[%c0_33, %c0_34], %72 {strides = array<i32>} : memref<64x1xf32, #tpu.memory_space<vmem>>, vector<64x1xf32>,
    return
  }
  func.func @transform_0(%arg0: i32) -> (i32, i32) {
    %c0_i32 = arith.constant 0 : i32
    %c0_i32_0 = arith.constant 0 : i32
    return %arg0, %c0_i32 : i32, i32
  }
  func.func @transform_1(%arg0: i32) -> (i32, i32) {
    %c0_i32 = arith.constant 0 : i32
    %c0_i32_0 = arith.constant 0 : i32
    return %arg0, %c0_i32 : i32, i32
  }
  func.func @transform_2(%arg0: i32) -> (i32, i32) {
    %c0_i32 = arith.constant 0 : i32
    %c0_i32_0 = arith.constant 0 : i32
    %c0_i32_1 = arith.constant 0 : i32
    return %c0_i32, %c0_i32_0 : i32, i32
  }
  func.func @transform_3(%arg0: i32) -> (i32, i32) {
    %c0_i32 = arith.constant 0 : i32
    %c0_i32_0 = arith.constant 0 : i32
    %c0_i32_1 = arith.constant 0 : i32
    return %c0_i32, %c0_i32_0 : i32, i32
  }
  func.func @transform_4(%arg0: i32) -> (i32, i32) {
    %c0_i32 = arith.constant 0 : i32
    %c0_i32_0 = arith.constant 0 : i32
    %c0_i32_1 = arith.constant 0 : i32
    return %c0_i32, %c0_i32_0 : i32, i32
  }
  func.func @transform_5(%arg0: i32) -> (i32, i32) {
    %c0_i32 = arith.constant 0 : i32
    %c0_i32_0 = arith.constant 0 : i32
    %c0_i32_1 = arith.constant 0 : i32
    return %c0_i32, %c0_i32_0 : i32, i32
  }
  func.func @transform_6(%arg0: i32) -> (i32, i32) {
    %c0_i32 = arith.constant 0 : i32
    %c0_i32_0 = arith.constant 0 : i32
    return %arg0, %c0_i32 : i32, i32
  }
}

</mosaic_0001>

<llo_original>
// kernel: tpu_custom_call.1
$region0: #{tpu_custom_call.1}
  #allocation0 [shape = 'u32[]', space=smem, size = 0x4, offset = 0x4, fixed_abs, tag = 'smem constant byte address 0x4 - core index']
  #allocation1 [shape = 'u32[144,128]{1,0:T(1,128)}', space=vmem, size = 0x12000, scoped, tag = 'internal scratch']
  %s0 = inlined_call_operand.vmem [shape: f32[64,33], index: 0, kind: input, shape index: {}]
  %s1 = inlined_call_operand.vmem [shape: f32[64,4], index: 1, kind: input, shape index: {}]
  %s2 = inlined_call_operand.vmem [shape: bf16[33,256], index: 2, kind: input, shape index: {}]
  %s3 = inlined_call_operand.vmem [shape: bf16[256,128], index: 3, kind: input, shape index: {}]
  %s4 = inlined_call_operand.hbm [shape: bf16[512,128], index: 4, kind: input, shape index: {}]
  %s5 = inlined_call_operand.hbm [shape: f32[10,256], index: 5, kind: input, shape index: {}]
  %s6 = inlined_call_operand.vmem [shape: f32[64,1], index: 6, kind: output, shape index: {}]
  %s7 = sld [smem:[#allocation0]]
  $region42: #{tpu_custom_call.1} parent=0
    _
  %s9 = ssub.s32 1, %s7
  %s10 = scalar_select 0, %s9, %s7
  $region1: #{tpu_custom_call.1} parent=0
    #allocation2 [shape = 'u8[131072]{0}', space=vmem, size = 0x20000, scoped, tag = 'input window, operand 4, single buffered']
    #allocation3 [shape = 's32[1]{0}', space=sflag, size = 0x4, scoped, tag = 'scoped memory for tpu_custom_call.1']
    #allocation4 [shape = 'u8[16384]{0}', space=vmem, size = 0x4000, scoped, tag = 'input window, operand 5, single buffered']
    #allocation5 [shape = 's32[1]{0}', space=sflag, size = 0x4, scoped, tag = 'scoped memory for tpu_custom_call.1']
    %11 = vsyncpa [#allocation3], 0
    %12 = vsyncpa [#allocation5], 0
    // Predicated region
    $region2: #{tpu_custom_call.1} parent=1 // pred_check
      _
    $region3: #{tpu_custom_call.1} parent=1 // pred_check_branch
      %14 = sbr.rel (0) target = $region5
    $region4: #{tpu_custom_call.1} parent=1 // pred_region
      _
    $region5: #{tpu_custom_call.1} parent=1 // pred_fallthru
      _
    // Predicated region
    $region6: #{tpu_custom_call.1} parent=1 // pred_check
      _
    $region7: #{tpu_custom_call.1} parent=1 // pred_check_branch
      %16 = sbr.rel (0) target = $region9
    $region8: #{tpu_custom_call.1} parent=1 // pred_region
      _
    $region9: #{tpu_custom_call.1} parent=1 // pred_fallthru
      _
    // Predicated region
    $region10: #{tpu_custom_call.1} parent=1 // pred_check
      _
    $region11: #{tpu_custom_call.1} parent=1 // pred_check_branch
      %18 = sbr.rel (0) target = $region13
    $region12: #{tpu_custom_call.1} parent=1 // pred_region
      _
    $region13: #{tpu_custom_call.1} parent=1 // pred_fallthru
      _
    // Predicated region
    $region14: #{tpu_custom_call.1} parent=1 // pred_check
      _
    $region15: #{tpu_custom_call.1} parent=1 // pred_check_branch
      %20 = sbr.rel (0) target = $region17
    $region16: #{tpu_custom_call.1} parent=1 // pred_region
      _
    $region17: #{tpu_custom_call.1} parent=1 // pred_fallthru
      _
    // Predicated region
    $region18: #{tpu_custom_call.1} parent=1 // pred_check
      _
    $region19: #{tpu_custom_call.1} parent=1 // pred_check_branch
      %22 = sbr.rel (0) target = $region21
    $region20: #{tpu_custom_call.1} parent=1 // pred_region
      %s24 = ssub.s32 4096, 4096
      %25 = vsyncadd [#allocation3], %s24
      %s26 = sshll.u32 [#allocation2], 4
      %s27 = int_to_ptr.vmem [resolvable:$true] %s26
      %32 = dma.hbm_to_vmem [thread:$0]  %s4, 4096, %s27, [#allocation3], 64, 64, 4
    $region21: #{tpu_custom_call.1} parent=1 // pred_fallthru
      _
    // Predicated region
    $region22: #{tpu_custom_call.1} parent=1 // pred_check
      _
    $region23: #{tpu_custom_call.1} parent=1 // pred_check_branch
      %34 = sbr.rel (0) target = $region25
    $region24: #{tpu_custom_call.1} parent=1 // pred_region
      %s36 = ssub.s32 512, 512
      %37 = vsyncadd [#allocation5], %s36
      %s38 = sshll.u32 [#allocation4], 4
      %s39 = int_to_ptr.vmem [resolvable:$true] %s38
      %44 = dma.hbm_to_vmem [thread:$0]  %s5, 512, %s39, [#allocation5], 256, 256, 16
    $region25: #{tpu_custom_call.1} parent=1 // pred_fallthru
      _
    // Predicated region
    $region26: #{tpu_custom_call.1} parent=1 // pred_check
      _
    $region27: #{tpu_custom_call.1} parent=1 // pred_check_branch
      %46 = sbr.rel (0) target = $region29
    $region28: #{tpu_custom_call.1} parent=1 // pred_region
      %47 = dma.done [#allocation3], 4096
    $region29: #{tpu_custom_call.1} parent=1 // pred_fallthru
      _
    // Predicated region
    $region30: #{tpu_custom_call.1} parent=1 // pred_check
      _
    $region31: #{tpu_custom_call.1} parent=1 // pred_check_branch
      %49 = sbr.rel (0) target = $region33
    $region32: #{tpu_custom_call.1} parent=1 // pred_region
      %50 = dma.done [#allocation5], 512
    $region33: #{tpu_custom_call.1} parent=1 // pred_fallthru
      _
    %v52 = vld [vmem:[%s0] sm:$0xff]
    %v53 = vld [vmem:[%s0 + $0x8] sm:$0xff]
    %v54 = vld [vmem:[%s0 + $0x10] sm:$0xff]
    %v55 = vld [vmem:[%s0 + $0x18] sm:$0xff]
    %v56 = vld [vmem:[%s0 + $0x20] sm:$0xff]
    %v57 = vld [vmem:[%s0 + $0x28] sm:$0xff]
    %v58 = vld [vmem:[%s0 + $0x30] sm:$0xff]
    %v59 = vld [vmem:[%s0 + $0x38] sm:$0xff]
    %v60 = vpack.c.bf16 %v53, %v52
    %v61 = vpack.c.bf16 %v55, %v54
    %v62 = vpack.c.bf16 %v57, %v56
    %v63 = vpack.c.bf16 %v59, %v58
    %v64 = vld [vmem:[%s1] sm:$0xff]
    %v65 = vld [vmem:[%s1 + $0x8] sm:$0xff]
    %v66 = vld [vmem:[%s1 + $0x10] sm:$0xff]
    %v67 = vld [vmem:[%s1 + $0x18] sm:$0xff]
    %v68 = vld [vmem:[%s1 + $0x20] sm:$0xff]
    %v69 = vld [vmem:[%s1 + $0x28] sm:$0xff]
    %v70 = vld [vmem:[%s1 + $0x30] sm:$0xff]
    %v71 = vld [vmem:[%s1 + $0x38] sm:$0xff]
    %v72 = vld [vmem:[%s2] sm:$0xff]
    %v73 = vld [vmem:[%s2 + $0x8] sm:$0xff]
    %v74 = vld [vmem:[%s2 + $0x10] sm:$0xff]
    %v75 = vld [vmem:[%s2 + $0x18] sm:$0xff]
    %v76 = vld [vmem:[%s2 + $0x20] sm:$0x11]
    %v77 = vld [vmem:[#allocation4] ss:$8 sm:$0x3]
    %v79 = vlaneseq
    %v80 = vshrl.u32 %v79, 7
    %v81 = vsub.s32 0, %v80
    %v82 = vrot.slane %v77, %v81
    %v83 = vlaneseq
    %v84 = vshrl.u32 %v83, 7
    %v85 = vsub.s32 1, %v84
    %v86 = vrot.slane %v77, %v85
    %v94 = vunpack.c.l.b16 %v72
    %v95 = vunpack.c.h.b16 %v72
    %v96 = vunpack.c.l.b16 %v73
    %v97 = vunpack.c.h.b16 %v73
    %v98 = vunpack.c.l.b16 %v74
    %v99 = vunpack.c.h.b16 %v74
    %v100 = vunpack.c.l.b16 %v75
    %v101 = vunpack.c.h.b16 %v75
    %v102 = vunpack.c.l.b16 %v76
    %v103 = vunpack.c.h.b16 %v76
    %v104 = vpack.c.b16 %v96, %v94
    %v105 = vpack.c.b16 %v97, %v95
    %v106 = vpack.c.b16 %v100, %v98
    %v107 = vpack.c.b16 %v101, %v99
    %v108 = vpack.c.b16 %v102, %v102
    %v109 = vpack.c.b16 %v103, %v103
    %vm114 = vcmask 269312
    %v116 = vsel %vm114, %v60, 0
    %v119 = vsel %vm114, %v61, 0
    %v122 = vsel %vm114, %v62, 0
    %v125 = vsel %vm114, %v63, 0
    %vm127 = vcmask 1040384
    %v128 = vsel 0, 4294967295, 65535
    %v129 = vsel %vm127, %v128, 0
    %v131 = vand.u32 %v108, %v129
    %v134 = vand.u32 %v109, %v129
    %136 = vmatprep.subr.bf16.mxu0 %v105
    %137 = vmatpush1.bf16.msra.mxu0 %v104
    %138 = vmatprep.subr.bf16.mxu0 %v107
    %139 = vmatpush1.bf16.msra.mxu0 %v106
    %140 = vmatprep.subr.bf16.mxu0 %v134
    %141 = vmatpush1.bf16.msra.mxu0 %v131
    %142 = vmatprep.subr.bf16.mxu0 0
    %143 = vmatpush1.bf16.msra.mxu0 0
    %144 = vmatprep.subr.bf16.mxu0 0
    %145 = vmatpush1.bf16.msra.mxu0 0
    %146 = vmatprep.subr.bf16.mxu0 0
    %147 = vmatpush1.bf16.msra.mxu0 0
    %148 = vmatprep.subr.bf16.mxu0 0
    %149 = vmatpush1.bf16.msra.mxu0 0
    %150 = vmatprep.subr.bf16.mxu0 0
    %151 = vmatpush1.bf16.msra.mxu0 0
    %152 = vmatprep.subr.bf16.mxu0 0
    %153 = vmatpush1.bf16.msra.mxu0 0
    %154 = vmatprep.subr.bf16.mxu0 0
    %155 = vmatpush1.bf16.msra.mxu0 0
    %156 = vmatprep.subr.bf16.mxu0 0
    %157 = vmatpush1.bf16.msra.mxu0 0
    %158 = vmatprep.subr.bf16.mxu0 0
    %159 = vmatpush1.bf16.msra.mxu0 0
    %160 = vmatprep.subr.bf16.mxu0 0
    %161 = vmatpush1.bf16.msra.mxu0 0
    %162 = vmatprep.subr.bf16.mxu0 0
    %163 = vmatpush1.bf16.msra.mxu0 0
    %164 = vmatprep.subr.bf16.mxu0 0
    %165 = vmatpush1.bf16.msra.mxu0 0
    %166 = vmatprep.subr.bf16.mxu0 0
    %167 = vmatpush1.bf16.msra.mxu0 0
    %168 = vmatprep.mubr.bf16.mxu0 0
    %169 = vmatmul.mubr.bf16.gmra.mrb[0].mxu0 %v116
    %v170 = vpop.f32.mrb[0].mxu0
    %v171 = vadd.f32 %v82, %v170
    %v172 = vpop.f32.mrb[0].mxu0
    %v173 = vadd.f32 %v86, %v172
    %v174 = vpop.f32.mrb[0].mxu0
    %v175 = vadd.f32 %v82, %v174
    %v176 = vpop.f32.mrb[0].mxu0
    %v177 = vadd.f32 %v86, %v176
    %178 = vmatprep.mubr.bf16.mxu0 0
    %179 = vmatmul.mubr.bf16.gmra.mrb[0].mxu0 %v119
    %v180 = vpop.f32.mrb[0].mxu0
    %v181 = vadd.f32 %v82, %v180
    %v182 = vpop.f32.mrb[0].mxu0
    %v183 = vadd.f32 %v86, %v182
    %v184 = vpop.f32.mrb[0].mxu0
    %v185 = vadd.f32 %v82, %v184
    %v186 = vpop.f32.mrb[0].mxu0
    %v187 = vadd.f32 %v86, %v186
    %188 = vmatprep.mubr.bf16.mxu0 0
    %189 = vmatmul.mubr.bf16.gmra.mrb[0].mxu0 %v122
    %v190 = vpop.f32.mrb[0].mxu0
    %v191 = vadd.f32 %v82, %v190
    %v192 = vpop.f32.mrb[0].mxu0
    %v193 = vadd.f32 %v86, %v192
    %v194 = vpop.f32.mrb[0].mxu0
    %v195 = vadd.f32 %v82, %v194
    %v196 = vpop.f32.mrb[0].mxu0
    %v197 = vadd.f32 %v86, %v196
    %198 = vmatprep.mubr.bf16.mxu0 0
    %199 = vmatmul.mubr.bf16.gmra.mrb[0].mxu0 %v125
    %v200 = vpop.f32.mrb[0].mxu0
    %v201 = vadd.f32 %v82, %v200
    %v202 = vpop.f32.mrb[0].mxu0
    %v203 = vadd.f32 %v86, %v202
    %v204 = vpop.f32.mrb[0].mxu0
    %v205 = vadd.f32 %v82, %v204
    %v206 = vpop.f32.mrb[0].mxu0
    %v207 = vadd.f32 %v86, %v206
    %208 = vdwg.mxu0
    %v209 = vmax.f32 %v171, 0.0
    %v210 = vmax.f32 %v173, 0.0
    %v211 = vmax.f32 %v175, 0.0
    %v212 = vmax.f32 %v177, 0.0
    %v213 = vmax.f32 %v181, 0.0
    %v214 = vmax.f32 %v183, 0.0
    %v215 = vmax.f32 %v185, 0.0
    %v216 = vmax.f32 %v187, 0.0
    %v217 = vmax.f32 %v191, 0.0
    %v218 = vmax.f32 %v193, 0.0
    %v219 = vmax.f32 %v195, 0.0
    %v220 = vmax.f32 %v197, 0.0
    %v221 = vmax.f32 %v201, 0.0
    %v222 = vmax.f32 %v203, 0.0
    %v223 = vmax.f32 %v205, 0.0
    %v224 = vmax.f32 %v207, 0.0
    %v225 = vpack.c.bf16 %v211, %v209
    %v226 = vpack.c.bf16 %v212, %v210
    %v227 = vpack.c.bf16 %v215, %v213
    %v228 = vpack.c.bf16 %v216, %v214
    %v229 = vpack.c.bf16 %v219, %v217
    %v230 = vpack.c.bf16 %v220, %v218
    %v231 = vpack.c.bf16 %v223, %v221
    %v232 = vpack.c.bf16 %v224, %v222
    %v233 = vld [vmem:[%s3] sm:$0xf]
    %v234 = vld [vmem:[%s3 + $0x4] sm:$0xf]
    %v235 = vld [vmem:[%s3 + $0x8] sm:$0xf]
    %v236 = vld [vmem:[%s3 + $0xc] sm:$0xf]
    %v237 = vld [vmem:[%s3 + $0x10] sm:$0xf]
    %v238 = vld [vmem:[%s3 + $0x14] sm:$0xf]
    %v239 = vld [vmem:[%s3 + $0x18] sm:$0xf]
    %v240 = vld [vmem:[%s3 + $0x1c] sm:$0xf]
    %v241 = vld [vmem:[%s3 + $0x20] sm:$0xf]
    %v242 = vld [vmem:[%s3 + $0x24] sm:$0xf]
    %v243 = vld [vmem:[%s3 + $0x28] sm:$0xf]
    %v244 = vld [vmem:[%s3 + $0x2c] sm:$0xf]
    %v245 = vld [vmem:[%s3 + $0x30] sm:$0xf]
    %v246 = vld [vmem:[%s3 + $0x34] sm:$0xf]
    %v247 = vld [vmem:[%s3 + $0x38] sm:$0xf]
    %v248 = vld [vmem:[%s3 + $0x3c] sm:$0xf]
    %v249 = vld [vmem:[%s3 + $0x40] sm:$0xf]
    %v250 = vld [vmem:[%s3 + $0x44] sm:$0xf]
    %v251 = vld [vmem:[%s3 + $0x48] sm:$0xf]
    %v252 = vld [vmem:[%s3 + $0x4c] sm:$0xf]
    %v253 = vld [vmem:[%s3 + $0x50] sm:$0xf]
    %v254 = vld [vmem:[%s3 + $0x54] sm:$0xf]
    %v255 = vld [vmem:[%s3 + $0x58] sm:$0xf]
    %v256 = vld [vmem:[%s3 + $0x5c] sm:$0xf]
    %v257 = vld [vmem:[%s3 + $0x60] sm:$0xf]
    %v258 = vld [vmem:[%s3 + $0x64] sm:$0xf]
    %v259 = vld [vmem:[%s3 + $0x68] sm:$0xf]
    %v260 = vld [vmem:[%s3 + $0x6c] sm:$0xf]
    %v261 = vld [vmem:[%s3 + $0x70] sm:$0xf]
    %v262 = vld [vmem:[%s3 + $0x74] sm:$0xf]
    %v263 = vld [vmem:[%s3 + $0x78] sm:$0xf]
    %v264 = vld [vmem:[%s3 + $0x7c] sm:$0xf]
    %v265 = vld [vmem:[#allocation4 + $0x1] ss:$0 sm:$0xff]
    %v266 = vld [vmem:[#allocation4 + $0x6] ss:$0 sm:$0xff]
    %268 = vset.pattern.permute.xlu0 0
    %269 = vperm.xlu0 %268, %v64
    %v270 = vpop.permute.xlu0 %269
    %273 = vset.pattern.permute.xlu0 0
    %274 = vperm.xlu0 %273, %v65
    %v275 = vpop.permute.xlu0 %274
    %278 = vset.pattern.permute.xlu0 0
    %279 = vperm.xlu0 %278, %v66
    %v280 = vpop.permute.xlu0 %279
    %283 = vset.pattern.permute.xlu0 0
    %284 = vperm.xlu0 %283, %v67
    %v285 = vpop.permute.xlu0 %284
    %288 = vset.pattern.permute.xlu0 0
    %289 = vperm.xlu0 %288, %v68
    %v290 = vpop.permute.xlu0 %289
    %293 = vset.pattern.permute.xlu0 0
    %294 = vperm.xlu0 %293, %v69
    %v295 = vpop.permute.xlu0 %294
    %298 = vset.pattern.permute.xlu0 0
    %299 = vperm.xlu0 %298, %v70
    %v300 = vpop.permute.xlu0 %299
    %303 = vset.pattern.permute.xlu0 0
    %304 = vperm.xlu0 %303, %v71
    %v305 = vpop.permute.xlu0 %304
    %v307 = vmul.f32 %v270, %v266
    %v308 = vmul.f32 %v275, %v266
    %v309 = vmul.f32 %v280, %v266
    %v310 = vmul.f32 %v285, %v266
    %v311 = vmul.f32 %v290, %v266
    %v312 = vmul.f32 %v295, %v266
    %v313 = vmul.f32 %v300, %v266
    %v314 = vmul.f32 %v305, %v266
    %v315 = vadd.f32 %v265, %v307
    %v316 = vadd.f32 %v265, %v308
    %v317 = vadd.f32 %v265, %v309
    %v318 = vadd.f32 %v265, %v310
    %v319 = vadd.f32 %v265, %v311
    %v320 = vadd.f32 %v265, %v312
    %v321 = vadd.f32 %v265, %v313
    %v322 = vadd.f32 %v265, %v314
    %v323 = vld [vmem:[#allocation4 + $0x7] ss:$0 sm:$0xff]
    %324 = vset.pattern.permute.xlu0 1
    %325 = vperm.xlu0 %324, %v64
    %v326 = vpop.permute.xlu0 %325
    %328 = vset.pattern.permute.xlu0 1
    %329 = vperm.xlu0 %328, %v65
    %v330 = vpop.permute.xlu0 %329
    %332 = vset.pattern.permute.xlu0 1
    %333 = vperm.xlu0 %332, %v66
    %v334 = vpop.permute.xlu0 %333
    %336 = vset.pattern.permute.xlu0 1
    %337 = vperm.xlu0 %336, %v67
    %v338 = vpop.permute.xlu0 %337
    %340 = vset.pattern.permute.xlu0 1
    %341 = vperm.xlu0 %340, %v68
    %v342 = vpop.permute.xlu0 %341
    %344 = vset.pattern.permute.xlu0 1
    %345 = vperm.xlu0 %344, %v69
    %v346 = vpop.permute.xlu0 %345
    %348 = vset.pattern.permute.xlu0 1
    %349 = vperm.xlu0 %348, %v70
    %v350 = vpop.permute.xlu0 %349
    %352 = vset.pattern.permute.xlu0 1
    %353 = vperm.xlu0 %352, %v71
    %v354 = vpop.permute.xlu0 %353
    %v356 = vmul.f32 %v326, %v323
    %v357 = vmul.f32 %v330, %v323
    %v358 = vmul.f32 %v334, %v323
    %v359 = vmul.f32 %v338, %v323
    %v360 = vmul.f32 %v342, %v323
    %v361 = vmul.f32 %v346, %v323
    %v362 = vmul.f32 %v350, %v323
    %v363 = vmul.f32 %v354, %v323
    %v364 = vadd.f32 %v315, %v356
    %v365 = vadd.f32 %v316, %v357
    %v366 = vadd.f32 %v317, %v358
    %v367 = vadd.f32 %v318, %v359
    %v368 = vadd.f32 %v319, %v360
    %v369 = vadd.f32 %v320, %v361
    %v370 = vadd.f32 %v321, %v362
    %v371 = vadd.f32 %v322, %v363
    %v372 = vld [vmem:[#allocation4 + $0x10] ss:$0 sm:$0xff]
    %373 = vset.pattern.permute.xlu0 2
    %374 = vperm.xlu0 %373, %v64
    %v375 = vpop.permute.xlu0 %374
    %377 = vset.pattern.permute.xlu0 2
    %378 = vperm.xlu0 %377, %v65
    %v379 = vpop.permute.xlu0 %378
    %381 = vset.pattern.permute.xlu0 2
    %382 = vperm.xlu0 %381, %v66
    %v383 = vpop.permute.xlu0 %382
    %385 = vset.pattern.permute.xlu0 2
    %386 = vperm.xlu0 %385, %v67
    %v387 = vpop.permute.xlu0 %386
    %389 = vset.pattern.permute.xlu0 2
    %390 = vperm.xlu0 %389, %v68
    %v391 = vpop.permute.xlu0 %390
    %393 = vset.pattern.permute.xlu0 2
    %394 = vperm.xlu0 %393, %v69
    %v395 = vpop.permute.xlu0 %394
    %397 = vset.pattern.permute.xlu0 2
    %398 = vperm.xlu0 %397, %v70
    %v399 = vpop.permute.xlu0 %398
    %401 = vset.pattern.permute.xlu0 2
    %402 = vperm.xlu0 %401, %v71
    %v403 = vpop.permute.xlu0 %402
    %v405 = vmul.f32 %v375, %v372
    %v406 = vmul.f32 %v379, %v372
    %v407 = vmul.f32 %v383, %v372
    %v408 = vmul.f32 %v387, %v372
    %v409 = vmul.f32 %v391, %v372
    %v410 = vmul.f32 %v395, %v372
    %v411 = vmul.f32 %v399, %v372
    %v412 = vmul.f32 %v403, %v372
    %v413 = vadd.f32 %v364, %v405
    %v414 = vadd.f32 %v365, %v406
    %v415 = vadd.f32 %v366, %v407
    %v416 = vadd.f32 %v367, %v408
    %v417 = vadd.f32 %v368, %v409
    %v418 = vadd.f32 %v369, %v410
    %v419 = vadd.f32 %v370, %v411
    %v420 = vadd.f32 %v371, %v412
    %v421 = vld [vmem:[#allocation4 + $0x11] ss:$0 sm:$0xff]
    %422 = vset.pattern.permute.xlu0 3
    %423 = vperm.xlu0 %422, %v64
    %v424 = vpop.permute.xlu0 %423
    %426 = vset.pattern.permute.xlu0 3
    %427 = vperm.xlu0 %426, %v65
    %v428 = vpop.permute.xlu0 %427
    %430 = vset.pattern.permute.xlu0 3
    %431 = vperm.xlu0 %430, %v66
    %v432 = vpop.permute.xlu0 %431
    %434 = vset.pattern.permute.xlu0 3
    %435 = vperm.xlu0 %434, %v67
    %v436 = vpop.permute.xlu0 %435
    %438 = vset.pattern.permute.xlu0 3
    %439 = vperm.xlu0 %438, %v68
    %v440 = vpop.permute.xlu0 %439
    %442 = vset.pattern.permute.xlu0 3
    %443 = vperm.xlu0 %442, %v69
    %v444 = vpop.permute.xlu0 %443
    %446 = vset.pattern.permute.xlu0 3
    %447 = vperm.xlu0 %446, %v70
    %v448 = vpop.permute.xlu0 %447
    %450 = vset.pattern.permute.xlu0 3
    %451 = vperm.xlu0 %450, %v71
    %v452 = vpop.permute.xlu0 %451
    %v454 = vmul.f32 %v424, %v421
    %v455 = vmul.f32 %v428, %v421
    %v456 = vmul.f32 %v432, %v421
    %v457 = vmul.f32 %v436, %v421
    %v458 = vmul.f32 %v440, %v421
    %v459 = vmul.f32 %v444, %v421
    %v460 = vmul.f32 %v448, %v421
    %v461 = vmul.f32 %v452, %v421
    %v462 = vadd.f32 %v413, %v454
    %v463 = vadd.f32 %v414, %v455
    %v464 = vadd.f32 %v415, %v456
    %v465 = vadd.f32 %v416, %v457
    %v466 = vadd.f32 %v417, %v458
    %v467 = vadd.f32 %v418, %v459
    %v468 = vadd.f32 %v419, %v460
    %v469 = vadd.f32 %v420, %v461
    %v502 = vunpack.c.l.b16 %v233
    %v503 = vunpack.c.l.b16 %v234
    %v504 = vunpack.c.l.b16 %v235
    %v505 = vunpack.c.l.b16 %v236
    %v506 = vunpack.c.l.b16 %v237
    %v507 = vunpack.c.l.b16 %v238
    %v508 = vunpack.c.l.b16 %v239
    %v509 = vunpack.c.l.b16 %v240
    %v510 = vunpack.c.l.b16 %v241
    %v511 = vunpack.c.l.b16 %v242
    %v512 = vunpack.c.l.b16 %v243
    %v513 = vunpack.c.l.b16 %v244
    %v514 = vunpack.c.l.b16 %v245
    %v515 = vunpack.c.l.b16 %v246
    %v516 = vunpack.c.l.b16 %v247
    %v517 = vunpack.c.l.b16 %v248
    %v518 = vunpack.c.l.b16 %v249
    %v519 = vunpack.c.l.b16 %v250
    %v520 = vunpack.c.l.b16 %v251
    %v521 = vunpack.c.l.b16 %v252
    %v522 = vunpack.c.l.b16 %v253
    %v523 = vunpack.c.l.b16 %v254
    %v524 = vunpack.c.l.b16 %v255
    %v525 = vunpack.c.l.b16 %v256
    %v526 = vunpack.c.l.b16 %v257
    %v527 = vunpack.c.l.b16 %v258
    %v528 = vunpack.c.l.b16 %v259
    %v529 = vunpack.c.l.b16 %v260
    %v530 = vunpack.c.l.b16 %v261
    %v531 = vunpack.c.l.b16 %v262
    %v532 = vunpack.c.l.b16 %v263
    %v533 = vunpack.c.l.b16 %v264
    %v534 = vpack.c.b16 %v503, %v502
    %v535 = vpack.c.b16 %v505, %v504
    %v536 = vpack.c.b16 %v507, %v506
    %v537 = vpack.c.b16 %v509, %v508
    %v538 = vpack.c.b16 %v511, %v510
    %v539 = vpack.c.b16 %v513, %v512
    %v540 = vpack.c.b16 %v515, %v514
    %v541 = vpack.c.b16 %v517, %v516
    %v542 = vpack.c.b16 %v519, %v518
    %v543 = vpack.c.b16 %v521, %v520
    %v544 = vpack.c.b16 %v523, %v522
    %v545 = vpack.c.b16 %v525, %v524
    %v546 = vpack.c.b16 %v527, %v526
    %v547 = vpack.c.b16 %v529, %v528
    %v548 = vpack.c.b16 %v531, %v530
    %v549 = vpack.c.b16 %v533, %v532
    %566 = vmatprep.subr.bf16.mxu0 0
    %567 = vmatpush1.bf16.msra.mxu0 %v534
    %568 = vmatprep.subr.bf16.mxu0 0
    %569 = vmatpush1.bf16.msra.mxu0 %v535
    %570 = vmatprep.subr.bf16.mxu0 0
    %571 = vmatpush1.bf16.msra.mxu0 %v536
    %572 = vmatprep.subr.bf16.mxu0 0
    %573 = vmatpush1.bf16.msra.mxu0 %v537
    %574 = vmatprep.subr.bf16.mxu0 0
    %575 = vmatpush1.bf16.msra.mxu0 %v538
    %576 = vmatprep.subr.bf16.mxu0 0
    %577 = vmatpush1.bf16.msra.mxu0 %v539
    %578 = vmatprep.subr.bf16.mxu0 0
    %579 = vmatpush1.bf16.msra.mxu0 %v540
    %580 = vmatprep.subr.bf16.mxu0 0
    %581 = vmatpush1.bf16.msra.mxu0 %v541
    %582 = vmatprep.subr.bf16.mxu0 0
    %583 = vmatpush1.bf16.msra.mxu0 %v542
    %584 = vmatprep.subr.bf16.mxu0 0
    %585 = vmatpush1.bf16.msra.mxu0 %v543
    %586 = vmatprep.subr.bf16.mxu0 0
    %587 = vmatpush1.bf16.msra.mxu0 %v544
    %588 = vmatprep.subr.bf16.mxu0 0
    %589 = vmatpush1.bf16.msra.mxu0 %v545
    %590 = vmatprep.subr.bf16.mxu0 0
    %591 = vmatpush1.bf16.msra.mxu0 %v546
    %592 = vmatprep.subr.bf16.mxu0 0
    %593 = vmatpush1.bf16.msra.mxu0 %v547
    %594 = vmatprep.subr.bf16.mxu0 0
    %595 = vmatpush1.bf16.msra.mxu0 %v548
    %596 = vmatprep.subr.bf16.mxu0 0
    %597 = vmatpush1.bf16.msra.mxu0 %v549
    %598 = vmatprep.mubr.bf16.mxu0 %v226
    %599 = vmatmul.mubr.bf16.gmra.mrb[0].mxu0 %v225
    %v600 = vpop.f32.mrb[0].mxu0
    %v601 = vadd.f32 %v462, %v600
    %v602 = vpop.f32.mrb[0].mxu0
    %v603 = vpop.f32.mrb[0].mxu0
    %v604 = vadd.f32 %v463, %v603
    %v605 = vpop.f32.mrb[0].mxu0
    %606 = vmatprep.mubr.bf16.mxu0 %v228
    %607 = vmatmul.mubr.bf16.gmra.mrb[0].mxu0 %v227
    %v608 = vpop.f32.mrb[0].mxu0
    %v609 = vadd.f32 %v464, %v608
    %v610 = vpop.f32.mrb[0].mxu0
    %v611 = vpop.f32.mrb[0].mxu0
    %v612 = vadd.f32 %v465, %v611
    %v613 = vpop.f32.mrb[0].mxu0
    %614 = vmatprep.mubr.bf16.mxu0 %v230
    %615 = vmatmul.mubr.bf16.gmra.mrb[0].mxu0 %v229
    %v616 = vpop.f32.mrb[0].mxu0
    %v617 = vadd.f32 %v466, %v616
    %v618 = vpop.f32.mrb[0].mxu0
    %v619 = vpop.f32.mrb[0].mxu0
    %v620 = vadd.f32 %v467, %v619
    %v621 = vpop.f32.mrb[0].mxu0
    %622 = vmatprep.mubr.bf16.mxu0 %v232
    %623 = vmatmul.mubr.bf16.gmra.mrb[0].mxu0 %v231
    %v624 = vpop.f32.mrb[0].mxu0
    %v625 = vadd.f32 %v468, %v624
    %v626 = vpop.f32.mrb[0].mxu0
    %v627 = vpop.f32.mrb[0].mxu0
    %v628 = vadd.f32 %v469, %v627
    %v629 = vpop.f32.mrb[0].mxu0
    %630 = vdwg.mxu0
    %v631 = vmax.f32 %v601, 0.0
    %v632 = vmax.f32 %v604, 0.0
    %v633 = vmax.f32 %v609, 0.0
    %v634 = vmax.f32 %v612, 0.0
    %v635 = vmax.f32 %v617, 0.0
    %v636 = vmax.f32 %v620, 0.0
    %v637 = vmax.f32 %v625, 0.0
    %v638 = vmax.f32 %v628, 0.0
    %v639 = vpack.c.bf16 %v632, %v631
    %v640 = vpack.c.bf16 %v634, %v633
    %v641 = vpack.c.bf16 %v636, %v635
    %v642 = vpack.c.bf16 %v638, %v637
    %v643 = vld [vmem:[#allocation2] sm:$0xf]
    %v644 = vld [vmem:[#allocation2 + $0x4] sm:$0xf]
    %v645 = vld [vmem:[#allocation2 + $0x8] sm:$0xf]
    %v646 = vld [vmem:[#allocation2 + $0xc] sm:$0xf]
    %v647 = vld [vmem:[#allocation2 + $0x10] sm:$0xf]
    %v648 = vld [vmem:[#allocation2 + $0x14] sm:$0xf]
    %v649 = vld [vmem:[#allocation2 + $0x18] sm:$0xf]
    %v650 = vld [vmem:[#allocation2 + $0x1c] sm:$0xf]
    %v651 = vld [vmem:[#allocation2 + $0x20] sm:$0xf]
    %v652 = vld [vmem:[#allocation2 + $0x24] sm:$0xf]
    %v653 = vld [vmem:[#allocation2 + $0x28] sm:$0xf]
    %v654 = vld [vmem:[#allocation2 + $0x2c] sm:$0xf]
    %v655 = vld [vmem:[#allocation2 + $0x30] sm:$0xf]
    %v656 = vld [vmem:[#allocation2 + $0x34] sm:$0xf]
    %v657 = vld [vmem:[#allocation2 + $0x38] sm:$0xf]
    %v658 = vld [vmem:[#allocation2 + $0x3c] sm:$0xf]
    %v659 = vld [vmem:[#allocation4 + $0x2] ss:$0 sm:$0xff]
    %v676 = vunpack.c.l.b16 %v643
    %v677 = vunpack.c.l.b16 %v644
    %v678 = vunpack.c.l.b16 %v645
    %v679 = vunpack.c.l.b16 %v646
    %v680 = vunpack.c.l.b16 %v647
    %v681 = vunpack.c.l.b16 %v648
    %v682 = vunpack.c.l.b16 %v649
    %v683 = vunpack.c.l.b16 %v650
    %v684 = vunpack.c.l.b16 %v651
    %v685 = vunpack.c.l.b16 %v652
    %v686 = vunpack.c.l.b16 %v653
    %v687 = vunpack.c.l.b16 %v654
    %v688 = vunpack.c.l.b16 %v655
    %v689 = vunpack.c.l.b16 %v656
    %v690 = vunpack.c.l.b16 %v657
    %v691 = vunpack.c.l.b16 %v658
    %v692 = vpack.c.b16 %v677, %v676
    %v693 = vpack.c.b16 %v679, %v678
    %v694 = vpack.c.b16 %v681, %v680
    %v695 = vpack.c.b16 %v683, %v682
    %v696 = vpack.c.b16 %v685, %v684
    %v697 = vpack.c.b16 %v687, %v686
    %v698 = vpack.c.b16 %v689, %v688
    %v699 = vpack.c.b16 %v691, %v690
    %708 = vmatprep.subr.bf16.mxu0 0
    %709 = vmatpush1.bf16.msra.mxu0 %v692
    %710 = vmatprep.subr.bf16.mxu0 0
    %711 = vmatpush1.bf16.msra.mxu0 %v693
    %712 = vmatprep.subr.bf16.mxu0 0
    %713 = vmatpush1.bf16.msra.mxu0 %v694
    %714 = vmatprep.subr.bf16.mxu0 0
    %715 = vmatpush1.bf16.msra.mxu0 %v695
    %716 = vmatprep.subr.bf16.mxu0 0
    %717 = vmatpush1.bf16.msra.mxu0 %v696
    %718 = vmatprep.subr.bf16.mxu0 0
    %719 = vmatpush1.bf16.msra.mxu0 %v697
    %720 = vmatprep.subr.bf16.mxu0 0
    %721 = vmatpush1.bf16.msra.mxu0 %v698
    %722 = vmatprep.subr.bf16.mxu0 0
    %723 = vmatpush1.bf16.msra.mxu0 %v699
    %724 = vmatprep.subr.bf16.mxu0 0
    %725 = vmatpush1.bf16.msra.mxu0 0
    %726 = vmatprep.subr.bf16.mxu0 0
    %727 = vmatpush1.bf16.msra.mxu0 0
    %728 = vmatprep.subr.bf16.mxu0 0
    %729 = vmatpush1.bf16.msra.mxu0 0
    %730 = vmatprep.subr.bf16.mxu0 0
    %731 = vmatpush1.bf16.msra.mxu0 0
    %732 = vmatprep.subr.bf16.mxu0 0
    %733 = vmatpush1.bf16.msra.mxu0 0
    %734 = vmatprep.subr.bf16.mxu0 0
    %735 = vmatpush1.bf16.msra.mxu0 0
    %736 = vmatprep.subr.bf16.mxu0 0
    %737 = vmatpush1.bf16.msra.mxu0 0
    %738 = vmatprep.subr.bf16.mxu0 0
    %739 = vmatpush1.bf16.msra.mxu0 0
    %740 = vmatprep.mubr.bf16.mxu0 0
    %741 = vmatmul.mubr.bf16.gmra.mrb[0].mxu0 %v639
    %v742 = vpop.f32.mrb[0].mxu0
    %v743 = vadd.f32 %v659, %v742
    %v744 = vpop.f32.mrb[0].mxu0
    %v745 = vpop.f32.mrb[0].mxu0
    %v746 = vadd.f32 %v659, %v745
    %v747 = vpop.f32.mrb[0].mxu0
    %748 = vmatprep.mubr.bf16.mxu0 0
    %749 = vmatmul.mubr.bf16.gmra.mrb[0].mxu0 %v640
    %v750 = vpop.f32.mrb[0].mxu0
    %v751 = vadd.f32 %v659, %v750
    %v752 = vpop.f32.mrb[0].mxu0
    %v753 = vpop.f32.mrb[0].mxu0
    %v754 = vadd.f32 %v659, %v753
    %v755 = vpop.f32.mrb[0].mxu0
    %756 = vmatprep.mubr.bf16.mxu0 0
    %757 = vmatmul.mubr.bf16.gmra.mrb[0].mxu0 %v641
    %v758 = vpop.f32.mrb[0].mxu0
    %v759 = vadd.f32 %v659, %v758
    %v760 = vpop.f32.mrb[0].mxu0
    %v761 = vpop.f32.mrb[0].mxu0
    %v762 = vadd.f32 %v659, %v761
    %v763 = vpop.f32.mrb[0].mxu0
    %764 = vmatprep.mubr.bf16.mxu0 0
    %765 = vmatmul.mubr.bf16.gmra.mrb[0].mxu0 %v642
    %v766 = vpop.f32.mrb[0].mxu0
    %v767 = vadd.f32 %v659, %v766
    %v768 = vpop.f32.mrb[0].mxu0
    %v769 = vpop.f32.mrb[0].mxu0
    %v770 = vadd.f32 %v659, %v769
    %v771 = vpop.f32.mrb[0].mxu0
    %772 = vdwg.mxu0
    %v773 = vmax.f32 %v743, 0.0
    %v774 = vmax.f32 %v746, 0.0
    %v775 = vmax.f32 %v751, 0.0
    %v776 = vmax.f32 %v754, 0.0
    %v777 = vmax.f32 %v759, 0.0
    %v778 = vmax.f32 %v762, 0.0
    %v779 = vmax.f32 %v767, 0.0
    %v780 = vmax.f32 %v770, 0.0
    %v781 = vpack.c.bf16 %v774, %v773
    %v782 = vpack.c.bf16 %v776, %v775
    %v783 = vpack.c.bf16 %v778, %v777
    %v784 = vpack.c.bf16 %v780, %v779
    %v785 = vld [vmem:[#allocation2 + $0x40] sm:$0xf]
    %v786 = vld [vmem:[#allocation2 + $0x44] sm:$0xf]
    %v787 = vld [vmem:[#allocation2 + $0x48] sm:$0xf]
    %v788 = vld [vmem:[#allocation2 + $0x4c] sm:$0xf]
    %v789 = vld [vmem:[#allocation2 + $0x50] sm:$0xf]
    %v790 = vld [vmem:[#allocation2 + $0x54] sm:$0xf]
    %v791 = vld [vmem:[#allocation2 + $0x58] sm:$0xf]
    %v792 = vld [vmem:[#allocation2 + $0x5c] sm:$0xf]
    %v793 = vld [vmem:[#allocation2 + $0x60] sm:$0xf]
    %v794 = vld [vmem:[#allocation2 + $0x64] sm:$0xf]
    %v795 = vld [vmem:[#allocation2 + $0x68] sm:$0xf]
    %v796 = vld [vmem:[#allocation2 + $0x6c] sm:$0xf]
    %v797 = vld [vmem:[#allocation2 + $0x70] sm:$0xf]
    %v798 = vld [vmem:[#allocation2 + $0x74] sm:$0xf]
    %v799 = vld [vmem:[#allocation2 + $0x78] sm:$0xf]
    %v800 = vld [vmem:[#allocation2 + $0x7c] sm:$0xf]
    %v801 = vld [vmem:[#allocation4 + $0x3] ss:$0 sm:$0xff]
    %v818 = vunpack.c.l.b16 %v785
    %v819 = vunpack.c.l.b16 %v786
    %v820 = vunpack.c.l.b16 %v787
    %v821 = vunpack.c.l.b16 %v788
    %v822 = vunpack.c.l.b16 %v789
    %v823 = vunpack.c.l.b16 %v790
    %v824 = vunpack.c.l.b16 %v791
    %v825 = vunpack.c.l.b16 %v792
    %v826 = vunpack.c.l.b16 %v793
    %v827 = vunpack.c.l.b16 %v794
    %v828 = vunpack.c.l.b16 %v795
    %v829 = vunpack.c.l.b16 %v796
    %v830 = vunpack.c.l.b16 %v797
    %v831 = vunpack.c.l.b16 %v798
    %v832 = vunpack.c.l.b16 %v799
    %v833 = vunpack.c.l.b16 %v800
    %v834 = vpack.c.b16 %v819, %v818
    %v835 = vpack.c.b16 %v821, %v820
    %v836 = vpack.c.b16 %v823, %v822
    %v837 = vpack.c.b16 %v825, %v824
    %v838 = vpack.c.b16 %v827, %v826
    %v839 = vpack.c.b16 %v829, %v828
    %v840 = vpack.c.b16 %v831, %v830
    %v841 = vpack.c.b16 %v833, %v832
    %850 = vmatprep.subr.bf16.mxu0 0
    %851 = vmatpush1.bf16.msra.mxu0 %v834
    %852 = vmatprep.subr.bf16.mxu0 0
    %853 = vmatpush1.bf16.msra.mxu0 %v835
    %854 = vmatprep.subr.bf16.mxu0 0
    %855 = vmatpush1.bf16.msra.mxu0 %v836
    %856 = vmatprep.subr.bf16.mxu0 0
    %857 = vmatpush1.bf16.msra.mxu0 %v837
    %858 = vmatprep.subr.bf16.mxu0 0
    %859 = vmatpush1.bf16.msra.mxu0 %v838
    %860 = vmatprep.subr.bf16.mxu0 0
    %861 = vmatpush1.bf16.msra.mxu0 %v839
    %862 = vmatprep.subr.bf16.mxu0 0
    %863 = vmatpush1.bf16.msra.mxu0 %v840
    %864 = vmatprep.subr.bf16.mxu0 0
    %865 = vmatpush1.bf16.msra.mxu0 %v841
    %866 = vmatprep.subr.bf16.mxu0 0
    %867 = vmatpush1.bf16.msra.mxu0 0
    %868 = vmatprep.subr.bf16.mxu0 0
    %869 = vmatpush1.bf16.msra.mxu0 0
    %870 = vmatprep.subr.bf16.mxu0 0
    %871 = vmatpush1.bf16.msra.mxu0 0
    %872 = vmatprep.subr.bf16.mxu0 0
    %873 = vmatpush1.bf16.msra.mxu0 0
    %874 = vmatprep.subr.bf16.mxu0 0
    %875 = vmatpush1.bf16.msra.mxu0 0
    %876 = vmatprep.subr.bf16.mxu0 0
    %877 = vmatpush1.bf16.msra.mxu0 0
    %878 = vmatprep.subr.bf16.mxu0 0
    %879 = vmatpush1.bf16.msra.mxu0 0
    %880 = vmatprep.subr.bf16.mxu0 0
    %881 = vmatpush1.bf16.msra.mxu0 0
    %882 = vmatprep.mubr.bf16.mxu0 0
    %883 = vmatmul.mubr.bf16.gmra.mrb[0].mxu0 %v781
    %v884 = vpop.f32.mrb[0].mxu0
    %v885 = vadd.f32 %v801, %v884
    %v886 = vpop.f32.mrb[0].mxu0
    %v887 = vpop.f32.mrb[0].mxu0
    %v888 = vadd.f32 %v801, %v887
    %v889 = vpop.f32.mrb[0].mxu0
    %890 = vmatprep.mubr.bf16.mxu0 0
    %891 = vmatmul.mubr.bf16.gmra.mrb[0].mxu0 %v782
    %v892 = vpop.f32.mrb[0].mxu0
    %v893 = vadd.f32 %v801, %v892
    %v894 = vpop.f32.mrb[0].mxu0
    %v895 = vpop.f32.mrb[0].mxu0
    %v896 = vadd.f32 %v801, %v895
    %v897 = vpop.f32.mrb[0].mxu0
    %898 = vmatprep.mubr.bf16.mxu0 0
    %899 = vmatmul.mubr.bf16.gmra.mrb[0].mxu0 %v783
    %v900 = vpop.f32.mrb[0].mxu0
    %v901 = vadd.f32 %v801, %v900
    %v902 = vpop.f32.mrb[0].mxu0
    %v903 = vpop.f32.mrb[0].mxu0
    %v904 = vadd.f32 %v801, %v903
    %v905 = vpop.f32.mrb[0].mxu0
    %906 = vmatprep.mubr.bf16.mxu0 0
    %907 = vmatmul.mubr.bf16.gmra.mrb[0].mxu0 %v784
    %v908 = vpop.f32.mrb[0].mxu0
    %v909 = vadd.f32 %v801, %v908
    %v910 = vpop.f32.mrb[0].mxu0
    %v911 = vpop.f32.mrb[0].mxu0
    %v912 = vadd.f32 %v801, %v911
    %v913 = vpop.f32.mrb[0].mxu0
    %914 = vdwg.mxu0
    %v915 = vmax.f32 %v885, 0.0
    %v916 = vmax.f32 %v888, 0.0
    %v917 = vmax.f32 %v893, 0.0
    %v918 = vmax.f32 %v896, 0.0
    %v919 = vmax.f32 %v901, 0.0
    %v920 = vmax.f32 %v904, 0.0
    %v921 = vmax.f32 %v909, 0.0
    %v922 = vmax.f32 %v912, 0.0
    %v923 = vpack.c.bf16 %v916, %v915
    %v924 = vpack.c.bf16 %v918, %v917
    %v925 = vpack.c.bf16 %v920, %v919
    %v926 = vpack.c.bf16 %v922, %v921
    %v927 = vld [vmem:[#allocation2 + $0x80] sm:$0xf]
    %v928 = vld [vmem:[#allocation2 + $0x84] sm:$0xf]
    %v929 = vld [vmem:[#allocation2 + $0x88] sm:$0xf]
    %v930 = vld [vmem:[#allocation2 + $0x8c] sm:$0xf]
    %v931 = vld [vmem:[#allocation2 + $0x90] sm:$0xf]
    %v932 = vld [vmem:[#allocation2 + $0x94] sm:$0xf]
    %v933 = vld [vmem:[#allocation2 + $0x98] sm:$0xf]
    %v934 = vld [vmem:[#allocation2 + $0x9c] sm:$0xf]
    %v935 = vld [vmem:[#allocation2 + $0xa0] sm:$0xf]
    %v936 = vld [vmem:[#allocation2 + $0xa4] sm:$0xf]
    %v937 = vld [vmem:[#allocation2 + $0xa8] sm:$0xf]
    %v938 = vld [vmem:[#allocation2 + $0xac] sm:$0xf]
    %v939 = vld [vmem:[#allocation2 + $0xb0] sm:$0xf]
    %v940 = vld [vmem:[#allocation2 + $0xb4] sm:$0xf]
    %v941 = vld [vmem:[#allocation2 + $0xb8] sm:$0xf]
    %v942 = vld [vmem:[#allocation2 + $0xbc] sm:$0xf]
    %v943 = vld [vmem:[#allocation4 + $0x4] ss:$0 sm:$0xff]
    %v960 = vunpack.c.l.b16 %v927
    %v961 = vunpack.c.l.b16 %v928
    %v962 = vunpack.c.l.b16 %v929
    %v963 = vunpack.c.l.b16 %v930
    %v964 = vunpack.c.l.b16 %v931
    %v965 = vunpack.c.l.b16 %v932
    %v966 = vunpack.c.l.b16 %v933
    %v967 = vunpack.c.l.b16 %v934
    %v968 = vunpack.c.l.b16 %v935
    %v969 = vunpack.c.l.b16 %v936
    %v970 = vunpack.c.l.b16 %v937
    %v971 = vunpack.c.l.b16 %v938
    %v972 = vunpack.c.l.b16 %v939
    %v973 = vunpack.c.l.b16 %v940
    %v974 = vunpack.c.l.b16 %v941
    %v975 = vunpack.c.l.b16 %v942
    %v976 = vpack.c.b16 %v961, %v960
    %v977 = vpack.c.b16 %v963, %v962
    %v978 = vpack.c.b16 %v965, %v964
    %v979 = vpack.c.b16 %v967, %v966
    %v980 = vpack.c.b16 %v969, %v968
    %v981 = vpack.c.b16 %v971, %v970
    %v982 = vpack.c.b16 %v973, %v972
    %v983 = vpack.c.b16 %v975, %v974
    %992 = vmatprep.subr.bf16.mxu0 0
    %993 = vmatpush1.bf16.msra.mxu0 %v976
    %994 = vmatprep.subr.bf16.mxu0 0
    %995 = vmatpush1.bf16.msra.mxu0 %v977
    %996 = vmatprep.subr.bf16.mxu0 0
    %997 = vmatpush1.bf16.msra.mxu0 %v978
    %998 = vmatprep.subr.bf16.mxu0 0
    %999 = vmatpush1.bf16.msra.mxu0 %v979
    %1000 = vmatprep.subr.bf16.mxu0 0
    %1001 = vmatpush1.bf16.msra.mxu0 %v980
    %1002 = vmatprep.subr.bf16.mxu0 0
    %1003 = vmatpush1.bf16.msra.mxu0 %v981
    %1004 = vmatprep.subr.bf16.mxu0 0
    %1005 = vmatpush1.bf16.msra.mxu0 %v982
    %1006 = vmatprep.subr.bf16.mxu0 0
    %1007 = vmatpush1.bf16.msra.mxu0 %v983
    %1008 = vmatprep.subr.bf16.mxu0 0
    %1009 = vmatpush1.bf16.msra.mxu0 0
    %1010 = vmatprep.subr.bf16.mxu0 0
    %1011 = vmatpush1.bf16.msra.mxu0 0
    %1012 = vmatprep.subr.bf16.mxu0 0
    %1013 = vmatpush1.bf16.msra.mxu0 0
    %1014 = vmatprep.subr.bf16.mxu0 0
    %1015 = vmatpush1.bf16.msra.mxu0 0
    %1016 = vmatprep.subr.bf16.mxu0 0
    %1017 = vmatpush1.bf16.msra.mxu0 0
    %1018 = vmatprep.subr.bf16.mxu0 0
    %1019 = vmatpush1.bf16.msra.mxu0 0
    %1020 = vmatprep.subr.bf16.mxu0 0
    %1021 = vmatpush1.bf16.msra.mxu0 0
    %1022 = vmatprep.subr.bf16.mxu0 0
    %1023 = vmatpush1.bf16.msra.mxu0 0
    %1024 = vmatprep.mubr.bf16.mxu0 0
    %1025 = vmatmul.mubr.bf16.gmra.mrb[0].mxu0 %v923
    %v1026 = vpop.f32.mrb[0].mxu0
    %v1027 = vadd.f32 %v943, %v1026
    %v1028 = vpop.f32.mrb[0].mxu0
    %v1029 = vpop.f32.mrb[0].mxu0
    %v1030 = vadd.f32 %v943, %v1029
    %v1031 = vpop.f32.mrb[0].mxu0
    %1032 = vmatprep.mubr.bf16.mxu0 0
    %1033 = vmatmul.mubr.bf16.gmra.mrb[0].mxu0 %v924
    %v1034 = vpop.f32.mrb[0].mxu0
    %v1035 = vadd.f32 %v943, %v1034
    %v1036 = vpop.f32.mrb[0].mxu0
    %v1037 = vpop.f32.mrb[0].mxu0
    %v1038 = vadd.f32 %v943, %v1037
    %v1039 = vpop.f32.mrb[0].mxu0
    %1040 = vmatprep.mubr.bf16.mxu0 0
    %1041 = vmatmul.mubr.bf16.gmra.mrb[0].mxu0 %v925
    %v1042 = vpop.f32.mrb[0].mxu0
    %v1043 = vadd.f32 %v943, %v1042
    %v1044 = vpop.f32.mrb[0].mxu0
    %v1045 = vpop.f32.mrb[0].mxu0
    %v1046 = vadd.f32 %v943, %v1045
    %v1047 = vpop.f32.mrb[0].mxu0
    %1048 = vmatprep.mubr.bf16.mxu0 0
    %1049 = vmatmul.mubr.bf16.gmra.mrb[0].mxu0 %v926
    %v1050 = vpop.f32.mrb[0].mxu0
    %v1051 = vadd.f32 %v943, %v1050
    %v1052 = vpop.f32.mrb[0].mxu0
    %v1053 = vpop.f32.mrb[0].mxu0
    %v1054 = vadd.f32 %v943, %v1053
    %v1055 = vpop.f32.mrb[0].mxu0
    %1056 = vdwg.mxu0
    %v1057 = vmax.f32 %v1027, 0.0
    %v1058 = vmax.f32 %v1030, 0.0
    %v1059 = vmax.f32 %v1035, 0.0
    %v1060 = vmax.f32 %v1038, 0.0
    %v1061 = vmax.f32 %v1043, 0.0
    %v1062 = vmax.f32 %v1046, 0.0
    %v1063 = vmax.f32 %v1051, 0.0
    %v1064 = vmax.f32 %v1054, 0.0
    %v1065 = vpack.c.bf16 %v1058, %v1057
    %v1066 = vpack.c.bf16 %v1060, %v1059
    %v1067 = vpack.c.bf16 %v1062, %v1061
    %v1068 = vpack.c.bf16 %v1064, %v1063
    %v1069 = vld [vmem:[#allocation2 + $0xc0] sm:$0xf]
    %v1070 = vld [vmem:[#allocation2 + $0xc4] sm:$0xf]
    %v1071 = vld [vmem:[#allocation2 + $0xc8] sm:$0xf]
    %v1072 = vld [vmem:[#allocation2 + $0xcc] sm:$0xf]
    %v1073 = vld [vmem:[#allocation2 + $0xd0] sm:$0xf]
    %v1074 = vld [vmem:[#allocation2 + $0xd4] sm:$0xf]
    %v1075 = vld [vmem:[#allocation2 + $0xd8] sm:$0xf]
    %v1076 = vld [vmem:[#allocation2 + $0xdc] sm:$0xf]
    %v1077 = vld [vmem:[#allocation2 + $0xe0] sm:$0xf]
    %v1078 = vld [vmem:[#allocation2 + $0xe4] sm:$0xf]
    %v1079 = vld [vmem:[#allocation2 + $0xe8] sm:$0xf]
    %v1080 = vld [vmem:[#allocation2 + $0xec] sm:$0xf]
    %v1081 = vld [vmem:[#allocation2 + $0xf0] sm:$0xf]
    %v1082 = vld [vmem:[#allocation2 + $0xf4] sm:$0xf]
    %v1083 = vld [vmem:[#allocation2 + $0xf8] sm:$0xf]
    %v1084 = vld [vmem:[#allocation2 + $0xfc] sm:$0xf]
    %v1101 = vunpack.c.l.b16 %v1069
    %v1102 = vunpack.c.l.b16 %v1070
    %v1103 = vunpack.c.l.b16 %v1071
    %v1104 = vunpack.c.l.b16 %v1072
    %v1105 = vunpack.c.l.b16 %v1073
    %v1106 = vunpack.c.l.b16 %v1074
    %v1107 = vunpack.c.l.b16 %v1075
    %v1108 = vunpack.c.l.b16 %v1076
    %v1109 = vunpack.c.l.b16 %v1077
    %v1110 = vunpack.c.l.b16 %v1078
    %v1111 = vunpack.c.l.b16 %v1079
    %v1112 = vunpack.c.l.b16 %v1080
    %v1113 = vunpack.c.l.b16 %v1081
    %v1114 = vunpack.c.l.b16 %v1082
    %v1115 = vunpack.c.l.b16 %v1083
    %v1116 = vunpack.c.l.b16 %v1084
    %v1117 = vpack.c.b16 %v1102, %v1101
    %v1118 = vpack.c.b16 %v1104, %v1103
    %v1119 = vpack.c.b16 %v1106, %v1105
    %v1120 = vpack.c.b16 %v1108, %v1107
    %v1121 = vpack.c.b16 %v1110, %v1109
    %v1122 = vpack.c.b16 %v1112, %v1111
    %v1123 = vpack.c.b16 %v1114, %v1113
    %v1124 = vpack.c.b16 %v1116, %v1115
    %1133 = vmatprep.subr.bf16.mxu0 0
    %1134 = vmatpush1.bf16.msra.mxu0 %v1117
    %1135 = vmatprep.subr.bf16.mxu0 0
    %1136 = vmatpush1.bf16.msra.mxu0 %v1118
    %1137 = vmatprep.subr.bf16.mxu0 0
    %1138 = vmatpush1.bf16.msra.mxu0 %v1119
    %1139 = vmatprep.subr.bf16.mxu0 0
    %1140 = vmatpush1.bf16.msra.mxu0 %v1120
    %1141 = vmatprep.subr.bf16.mxu0 0
    %1142 = vmatpush1.bf16.msra.mxu0 %v1121
    %1143 = vmatprep.subr.bf16.mxu0 0
    %1144 = vmatpush1.bf16.msra.mxu0 %v1122
    %1145 = vmatprep.subr.bf16.mxu0 0
    %1146 = vmatpush1.bf16.msra.mxu0 %v1123
    %1147 = vmatprep.subr.bf16.mxu0 0
    %1148 = vmatpush1.bf16.msra.mxu0 %v1124
    %1149 = vmatprep.subr.bf16.mxu0 0
    %1150 = vmatpush1.bf16.msra.mxu0 0
    %1151 = vmatprep.subr.bf16.mxu0 0
    %1152 = vmatpush1.bf16.msra.mxu0 0
    %1153 = vmatprep.subr.bf16.mxu0 0
    %1154 = vmatpush1.bf16.msra.mxu0 0
    %1155 = vmatprep.subr.bf16.mxu0 0
    %1156 = vmatpush1.bf16.msra.mxu0 0
    %1157 = vmatprep.subr.bf16.mxu0 0
    %1158 = vmatpush1.bf16.msra.mxu0 0
    %1159 = vmatprep.subr.bf16.mxu0 0
    %1160 = vmatpush1.bf16.msra.mxu0 0
    %1161 = vmatprep.subr.bf16.mxu0 0
    %1162 = vmatpush1.bf16.msra.mxu0 0
    %1163 = vmatprep.subr.bf16.mxu0 0
    %1164 = vmatpush1.bf16.msra.mxu0 0
    %1165 = vmatprep.mubr.bf16.mxu0 0
    %1166 = vmatmul.mubr.bf16.gmra.mrb[0].mxu0 %v1065
    %v1167 = vpop.f32.mrb[0].mxu0
    %v1168 = vadd.f32 0.0, %v1167
    %v1169 = vpop.f32.mrb[0].mxu0
    %v1170 = vpop.f32.mrb[0].mxu0
    %v1171 = vadd.f32 0.0, %v1170
    %v1172 = vpop.f32.mrb[0].mxu0
    %1173 = vmatprep.mubr.bf16.mxu0 0
    %1174 = vmatmul.mubr.bf16.gmra.mrb[0].mxu0 %v1066
    %v1175 = vpop.f32.mrb[0].mxu0
    %v1176 = vadd.f32 0.0, %v1175
    %v1177 = vpop.f32.mrb[0].mxu0
    %v1178 = vpop.f32.mrb[0].mxu0
    %v1179 = vadd.f32 0.0, %v1178
    %v1180 = vpop.f32.mrb[0].mxu0
    %1181 = vmatprep.mubr.bf16.mxu0 0
    %1182 = vmatmul.mubr.bf16.gmra.mrb[0].mxu0 %v1067
    %v1183 = vpop.f32.mrb[0].mxu0
    %v1184 = vadd.f32 0.0, %v1183
    %v1185 = vpop.f32.mrb[0].mxu0
    %v1186 = vpop.f32.mrb[0].mxu0
    %v1187 = vadd.f32 0.0, %v1186
    %v1188 = vpop.f32.mrb[0].mxu0
    %1189 = vmatprep.mubr.bf16.mxu0 0
    %1190 = vmatmul.mubr.bf16.gmra.mrb[0].mxu0 %v1068
    %v1191 = vpop.f32.mrb[0].mxu0
    %v1192 = vadd.f32 0.0, %v1191
    %v1193 = vpop.f32.mrb[0].mxu0
    %v1194 = vpop.f32.mrb[0].mxu0
    %v1195 = vadd.f32 0.0, %v1194
    %v1196 = vpop.f32.mrb[0].mxu0
    %1197 = vdwg.mxu0
    %v1198 = vld [vmem:[#allocation4 + $0x5] ss:$0 sm:$0xff]
    %v1199 = vadd.f32 %v1168, %v1198
    %v1200 = vadd.f32 %v1171, %v1198
    %v1201 = vadd.f32 %v1176, %v1198
    %v1202 = vadd.f32 %v1179, %v1198
    %v1203 = vadd.f32 %v1184, %v1198
    %v1204 = vadd.f32 %v1187, %v1198
    %v1205 = vadd.f32 %v1192, %v1198
    %v1206 = vadd.f32 %v1195, %v1198
    %vm1207 = vcmask 7168
    %1208 = vst.msk [vmem:[%s6] sm:$0xff] %vm1207, %v1199
    %1209 = vst.msk [vmem:[%s6 + $0x8] sm:$0xff] %vm1207, %v1200
    %1210 = vst.msk [vmem:[%s6 + $0x10] sm:$0xff] %vm1207, %v1201
    %1211 = vst.msk [vmem:[%s6 + $0x18] sm:$0xff] %vm1207, %v1202
    %1212 = vst.msk [vmem:[%s6 + $0x20] sm:$0xff] %vm1207, %v1203
    %1213 = vst.msk [vmem:[%s6 + $0x28] sm:$0xff] %vm1207, %v1204
    %1214 = vst.msk [vmem:[%s6 + $0x30] sm:$0xff] %vm1207, %v1205
    %1215 = vst.msk [vmem:[%s6 + $0x38] sm:$0xff] %vm1207, %v1206
    // Predicated region
    $region34: #{tpu_custom_call.1} parent=1 // pred_check
      _
    $region35: #{tpu_custom_call.1} parent=1 // pred_check_branch
      %1217 = sbr.rel (0) target = $region37
    $region36: #{tpu_custom_call.1} parent=1 // pred_region
      _
    $region37: #{tpu_custom_call.1} parent=1 // pred_fallthru
      _
    // Predicated region
    $region38: #{tpu_custom_call.1} parent=1 // pred_check
      _
    $region39: #{tpu_custom_call.1} parent=1 // pred_check_branch
      %1219 = sbr.rel (0) target = $region41
    $region40: #{tpu_custom_call.1} parent=1 // pred_region
      _
    $region41: #{tpu_custom_call.1} parent=1 // pred_fallthru
      _
    %1220 = vsyncpa [#allocation3], 1
    %1221 = vsyncpa [#allocation5], 1

</llo_original>
